<compile_context>
chip_gen: v5e
topology: v5e:2x2
jax: 0.10.0
libtpu: 0.0.40
codegen_flags: <defaults>
</compile_context>

<pallas_src>
import jax
import jax.numpy as jnp
from jax import lax
from jax.experimental import pallas as pl
from jax.experimental.pallas import tpu as pltpu


def _lstm_kernel(x_ref, wih_ref, wf_ref, bias_ref, out_ref, xz_sc, h_sc, c_sc):
    """One grid step processes a chunk of TT time steps (single batch row).

    Packed gate layout (8H wide, H-wide blocks): [ i1 i2 | f1 f2 | g1 g2 | o1 o2 ]
    Packed state layout (2H wide):               [ layer-1 | layer-2 ]

    x_ref   : (TT, I)   raw inputs for this chunk (selected batch row)
    wih_ref : (I, 8H)   layer-1 input weights, packed layout (layer-2 cols = 0)
    wf_ref  : (2H, 8H)  fused recurrent weights: rows 0:H = h1 -> [whh1 | wih2],
                        rows H:2H = h2 -> [0 | whh2]   (i/f/o cols pre-scaled 0.5)
    bias_ref: (1, 8H)   packed (b1, b2), i/f/o columns pre-scaled by 0.5
    out_ref : (TT, 2H)  packed hidden history; row t's LAST H lanes hold h2_t
                        (the first H lanes are a by-product and unused)
    xz_sc   : (TT, 8H)  VMEM scratch: per-chunk input projection (+ bias)
    h_sc    : (1, 2H)   packed [h1 | h2] state, persistent across chunks
    c_sc    : (1, 2H)   packed [c1 | c2] state, persistent across chunks
    """
    chunk = pl.program_id(0)
    TT = x_ref.shape[0]
    H2 = h_sc.shape[1]          # 2*H
    H = H2 // 2

    @pl.when(chunk == 0)
    def _():
        h_sc[...] = jnp.zeros_like(h_sc)
        c_sc[...] = jnp.zeros_like(c_sc)

    # Resident weights / bias (hoisted out of the time loop).
    wf = wf_ref[...]            # (2H, 8H)
    bias = bias_ref[...]        # (1, 8H)

    # Off-serial-path input projection for the whole chunk: one MXU pass.
    # Layer-2 columns of wih are zero, so they only pick up the folded b2.
    xz_sc[...] = jnp.dot(x_ref[...], wih_ref[...],
                         preferred_element_type=jnp.float32) + bias

    # Lane mask selecting the layer-1 half of packed (1, 2H) vectors.
    lane = lax.broadcasted_iota(jnp.int32, (1, H2), 1)
    l1mask = lane < H

    def cell(z, hp, cp):
        # i/f/o columns were pre-scaled by 0.5 in the wrapper, so a single
        # tanh pass yields tanh(z) for g and tanh(z/2) for i/f/o
        # (sigmoid(z) = 0.5*tanh(z/2) + 0.5).
        t = jnp.tanh(z)
        i = 0.5 * t[:, 0:H2] + 0.5
        f = 0.5 * t[:, H2:2 * H2] + 0.5
        g = t[:, 2 * H2:3 * H2]
        o = 0.5 * t[:, 3 * H2:4 * H2] + 0.5
        cn = f * cp + i * g
        hn = o * jnp.tanh(cn)
        return hn, cn

    hp0 = h_sc[...]             # [h1_{-1} | h2_{-1}]  (end of previous chunk)
    cp0 = c_sc[...]

    # ---- prologue: layer-1 step 0 of the chunk (layer-2 half discarded). ----
    z0 = jnp.dot(hp0, wf, preferred_element_type=jnp.float32) + xz_sc[0:1, :]
    hn0, cn0 = cell(z0, hp0, cp0)
    hp = jnp.where(l1mask, hn0, hp0)        # [h1_0 | h2_{-1}]
    cp = jnp.where(l1mask, cn0, cp0)        # [c1_0 | c2_{-1}]

    # ---- steady state: one fused matmul per step gives layer-1(t) and
    # ---- layer-2(t-1) gates together (1-step layer pipeline). ----
    def body(t, carry):
        hp, cp = carry                       # [h1_{t-1} | h2_{t-2}]
        z = (jnp.dot(hp, wf, preferred_element_type=jnp.float32)
             + xz_sc[pl.ds(t, 1), :])
        hn, cn = cell(z, hp, cp)             # [h1_t | h2_{t-1}]
        out_ref[pl.ds(t - 1, 1), :] = hn     # row t-1: h2_{t-1} in last H lanes
        return hn, cn

    unroll = True if TT <= 32 else 8
    hp, cp = lax.fori_loop(1, TT, body, (hp, cp), unroll=unroll)

    # ---- epilogue: layer-2 step TT-1 (layer-1 half discarded). ----
    zL = jnp.dot(hp, wf, preferred_element_type=jnp.float32) + bias
    hnL, cnL = cell(zL, hp, cp)
    hF = jnp.where(l1mask, hp, hnL)          # [h1_{TT-1} | h2_{TT-1}]
    cF = jnp.where(l1mask, cp, cnL)
    out_ref[TT - 1:TT, :] = hF

    # Persist packed states for the next chunk.
    h_sc[...] = hF
    c_sc[...] = cF


def _gate_split(w, H):
    """Split the trailing 4H axis into PyTorch-ordered [i, f, g, o] blocks,
    pre-scaling i/f/o by 0.5 so that sigmoid(z) = 0.5*tanh(z_scaled) + 0.5."""
    return (0.5 * w[..., 0:H], 0.5 * w[..., H:2 * H],
            w[..., 2 * H:3 * H], 0.5 * w[..., 3 * H:4 * H])


def _interleave(l1, l2):
    """Pack two layers' gate blocks as columns [i1 i2 | f1 f2 | g1 g2 | o1 o2]."""
    return jnp.concatenate([l1[0], l2[0], l1[1], l2[1],
                            l1[2], l2[2], l1[3], l2[3]], axis=-1)


def _pick_chunk(T, max_chunk=256):
    """Largest divisor of T that is <= max_chunk (time-chunk size)."""
    tt = min(T, max_chunk)
    while T % tt != 0:
        tt -= 1
    return tt


@jax.jit
def lstm_forward(x, params):
    """x: (B, T, I) batch_first, like the PyTorch module.

    Returns flatten(output[-1, :]) of shape (T * output_size,), matching
    torch.flatten(output[-1, :]) on the (B, T, O) batch_first output — i.e.
    only batch row B-1's full sequence is consumed, so only that row's
    recurrence is computed.
    """
    B, T, I = x.shape
    H = params["whh1_t"].shape[0]

    # Only the last batch row is consumed by the head.
    x_row = x[B - 1]                                     # (T, I), time-major

    # Fused recurrent weights (2H, 8H): rows 0:H = h1 -> [whh1 | wih2],
    # rows H:2H = h2 -> [0 | whh2]; columns packed [i1 i2 f1 f2 g1 g2 o1 o2].
    z_h = jnp.zeros((H, 4 * H), jnp.float32)
    z_i = jnp.zeros((I, 4 * H), jnp.float32)
    w_fused = jnp.concatenate(
        [_interleave(_gate_split(params["whh1_t"], H),
                     _gate_split(params["wih2_t"], H)),
         _interleave(_gate_split(z_h, H),
                     _gate_split(params["whh2_t"], H))], axis=0)   # (2H, 8H)
    wih_full = _interleave(_gate_split(params["wih1_t"], H),
                           _gate_split(z_i, H))                    # (I, 8H)
    bias_full = _interleave(_gate_split(params["b1"], H),
                            _gate_split(params["b2"], H))          # (1, 8H)

    TT = _pick_chunk(T)
    n_chunks = T // TT

    hist = pl.pallas_call(
        _lstm_kernel,
        out_shape=jax.ShapeDtypeStruct((T, 2 * H), jnp.float32),
        grid_spec=pltpu.PrefetchScalarGridSpec(
            num_scalar_prefetch=0,
            grid=(n_chunks,),
            in_specs=[
                pl.BlockSpec((TT, I), lambda c: (c, 0)),           # x chunk
                pl.BlockSpec((I, 8 * H), lambda c: (0, 0)),        # wih (resident)
                pl.BlockSpec((2 * H, 8 * H), lambda c: (0, 0)),    # w_fused (resident)
                pl.BlockSpec((1, 8 * H), lambda c: (0, 0)),        # bias (resident)
            ],
            out_specs=pl.BlockSpec((TT, 2 * H), lambda c: (c, 0)),
            scratch_shapes=[
                pltpu.VMEM((TT, 8 * H), jnp.float32),   # per-chunk input proj
                pltpu.VMEM((1, 2 * H), jnp.float32),    # packed [h1 | h2]
                pltpu.VMEM((1, 2 * H), jnp.float32),    # packed [c1 | c2]
            ],
        ),
        compiler_params=pltpu.CompilerParams(
            dimension_semantics=("arbitrary",),          # sequential recurrence
            vmem_limit_bytes=32 * 1024 * 1024,           # fits v5e/v6e/v7x scoped VMEM
        ),
    )(x_row, wih_full, w_fused, bias_full)

    # Head: single (T, H) x (H, O) matmul on the consumed row's h2 history.
    h2_hist = hist[:, H:]                                # (T, H)
    out = h2_hist @ params["wout_t"] + params["bout"]    # (T, O)
    return out.reshape(-1)


def lstm_reference(x, params):
    """Pure-JAX reference of the same forward pass (for verification)."""
    B, T, I = x.shape
    H = params["whh1_t"].shape[0]

    def cell(x_t, h, c, wih_t, whh_t, b):
        z = x_t @ wih_t + h @ whh_t + b
        i = jax.nn.sigmoid(z[:, :H])
        f = jax.nn.sigmoid(z[:, H:2 * H])
        g = jnp.tanh(z[:, 2 * H:3 * H])
        o = jax.nn.sigmoid(z[:, 3 * H:])
        c = f * c + i * g
        h = o * jnp.tanh(c)
        return h, c

    h1 = c1 = h2 = c2 = jnp.zeros((B, H), jnp.float32)
    outs = []
    for t in range(T):
        h1, c1 = cell(x[:, t], h1, c1, params["wih1_t"], params["whh1_t"],
                      params["b1"])
        h2, c2 = cell(h1, h2, c2, params["wih2_t"], params["whh2_t"],
                      params["b2"])
        outs.append(h2 @ params["wout_t"] + params["bout"])
    out = jnp.stack(outs, axis=1)   # (B, T, O) — batch_first, like PyTorch
    return out[-1].reshape(-1)      # flatten(output[-1, :])


def init_params(key, input_size, hidden_size, output_size):
    """Deterministic init mirroring PyTorch's U(-1/sqrt(H), 1/sqrt(H)).

    Weights are stored pre-transposed ((in, 4H) / (H, O)) and the two LSTM
    biases (b_ih + b_hh) are pre-summed, since that is all the forward needs.
    Gate order along the 4H axis matches PyTorch: [i, f, g, o].
    """
    k = 1.0 / jnp.sqrt(hidden_size)
    keys = jax.random.split(key, 10)
    u = lambda kk, shape: jax.random.uniform(kk, shape, jnp.float32, -k, k)
    H4 = 4 * hidden_size
    return {
        "wih1_t": u(keys[0], (input_size, H4)),
        "whh1_t": u(keys[1], (hidden_size, H4)),
        "b1": u(keys[2], (1, H4)) + u(keys[3], (1, H4)),
        "wih2_t": u(keys[4], (hidden_size, H4)),
        "whh2_t": u(keys[5], (hidden_size, H4)),
        "b2": u(keys[6], (1, H4)) + u(keys[7], (1, H4)),
        "wout_t": u(keys[8], (hidden_size, output_size)),
        "bout": u(keys[9], (1, output_size)),
    }


if __name__ == "__main__":
    B, T = 2, 8
    input_size, hidden_size, output_size = 16, 32, 4

    key = jax.random.PRNGKey(0)
    kx, kp = jax.random.split(key)
    x = jax.random.normal(kx, (B, T, input_size), jnp.float32)
    params = init_params(kp, input_size, hidden_size, output_size)

    out = jax.block_until_ready(lstm_forward(x, params))

    ref = lstm_reference(x, params)
    assert out.shape == (T * output_size,), out.shape
    assert jnp.allclose(out, ref, atol=1e-4, rtol=1e-4), (
        float(jnp.max(jnp.abs(out - ref))))

    print("KERNEL_OK")
</pallas_src>

<mosaic_0001>
module attributes {stable_mosaic.version = 11 : i64} {
  func.func @_lstm_kernel(%arg0: i32, %arg1: memref<8x16xf32, #tpu.memory_space<vmem>>, %arg2: memref<16x256xf32, #tpu.memory_space<vmem>>, %arg3: memref<64x256xf32, #tpu.memory_space<vmem>>, %arg4: memref<1x256xf32, #tpu.memory_space<vmem>>, %arg5: memref<8x64xf32, #tpu.memory_space<vmem>>, %arg6: memref<8x256xf32, #tpu.memory_space<vmem>>, %arg7: memref<1x64xf32, #tpu.memory_space<vmem>>, %arg8: memref<1x64xf32, #tpu.memory_space<vmem>>) attributes {dimension_semantics = [#tpu.dimension_semantics<arbitrary>], iteration_bounds = array<i64: 1>, scalar_prefetch = 0 : i64, scratch_operands = 3 : i64, tpu.core_type = #tpu.core_type<tc>, window_params = [{transform_indices = @transform_0, window_bounds = array<i64: 8, 16>}, {pipeline_mode = #tpu.pipeline_mode<synchronous>, transform_indices = @transform_1, window_bounds = array<i64: 16, 256>}, {pipeline_mode = #tpu.pipeline_mode<synchronous>, transform_indices = @transform_2, window_bounds = array<i64: 64, 256>}, {pipeline_mode = #tpu.pipeline_mode<synchronous>, transform_indices = @transform_3, window_bounds = array<i64: 1, 256>}, {transform_indices = @transform_4, window_bounds = array<i64: 8, 64>}]} {
    %c0_i32 = arith.constant 0 : i32
    %0 = arith.cmpi eq, %arg0, %c0_i32 : i32
    %1 = arith.extui %0 : i1 to i32
    %c0_i32_0 = arith.constant 0 : i32
    %2 = arith.cmpi ne, %1, %c0_i32_0 : i32
    scf.if %2 {
      %cst_106 = arith.constant 0.000000e+00 : f32
      %275 = vector.broadcast %cst_106 : f32 to vector<1x64xf32>
      %c0_107 = arith.constant 0 : index
      %c0_108 = arith.constant 0 : index
      %276 = vector.load %arg7[%c0_107, %c0_108] : memref<1x64xf32, #tpu.memory_space<vmem>>, vector<1x64xf32>
      tpu.vector_store %arg7[%c0_107, %c0_108], %275 {strides = array<i32>} : memref<1x64xf32, #tpu.memory_space<vmem>>, vector<1x64xf32>,
      %cst_109 = arith.constant 0.000000e+00 : f32
      %277 = vector.broadcast %cst_109 : f32 to vector<1x64xf32>
      %c0_110 = arith.constant 0 : index
      %c0_111 = arith.constant 0 : index
      %278 = vector.load %arg8[%c0_110, %c0_111] : memref<1x64xf32, #tpu.memory_space<vmem>>, vector<1x64xf32>
      tpu.vector_store %arg8[%c0_110, %c0_111], %277 {strides = array<i32>} : memref<1x64xf32, #tpu.memory_space<vmem>>, vector<1x64xf32>,
    } else {
    }
    %c0 = arith.constant 0 : index
    %c0_1 = arith.constant 0 : index
    %3 = vector.load %arg3[%c0, %c0_1] : memref<64x256xf32, #tpu.memory_space<vmem>>, vector<64x256xf32>
    %c0_2 = arith.constant 0 : index
    %c0_3 = arith.constant 0 : index
    %4 = vector.load %arg4[%c0_2, %c0_3] : memref<1x256xf32, #tpu.memory_space<vmem>>, vector<1x256xf32>
    %c0_4 = arith.constant 0 : index
    %c0_5 = arith.constant 0 : index
    %5 = vector.load %arg1[%c0_4, %c0_5] : memref<8x16xf32, #tpu.memory_space<vmem>>, vector<8x16xf32>
    %c0_6 = arith.constant 0 : index
    %c0_7 = arith.constant 0 : index
    %6 = vector.load %arg2[%c0_6, %c0_7] : memref<16x256xf32, #tpu.memory_space<vmem>>, vector<16x256xf32>
    %cst = arith.constant dense<0.000000e+00> : vector<8x256xf32>
    %7 = tpu.matmul %5, %6, %cst {dimension_numbers = #tpu.dot_dimension_numbers<[1], [0], [0], [1], [0, 0, 1, 1], [], []>} : vector<8x16xf32>, vector<16x256xf32>, vector<8x256xf32> -> vector<8x256xf32>
    %8 = vector.broadcast %4 : vector<1x256xf32> to vector<8x256xf32>
    %9 = arith.addf %7, %8 : vector<8x256xf32>
    %c0_8 = arith.constant 0 : index
    %c0_9 = arith.constant 0 : index
    %10 = vector.load %arg6[%c0_8, %c0_9] : memref<8x256xf32, #tpu.memory_space<vmem>>, vector<8x256xf32>
    tpu.vector_store %arg6[%c0_8, %c0_9], %9 {strides = array<i32>} : memref<8x256xf32, #tpu.memory_space<vmem>>, vector<8x256xf32>,
    %11 = tpu.iota {dimensions = array<i32: 1>} : vector<1x64xi32>
    %c32_i32 = arith.constant 32 : i32
    %12 = vector.broadcast %c32_i32 : i32 to vector<1x64xi32>
    %13 = arith.cmpi slt, %11, %12 : vector<1x64xi32>
    %c0_10 = arith.constant 0 : index
    %c0_11 = arith.constant 0 : index
    %14 = vector.load %arg7[%c0_10, %c0_11] : memref<1x64xf32, #tpu.memory_space<vmem>>, vector<1x64xf32>
    %c0_12 = arith.constant 0 : index
    %c0_13 = arith.constant 0 : index
    %15 = vector.load %arg8[%c0_12, %c0_13] : memref<1x64xf32, #tpu.memory_space<vmem>>, vector<1x64xf32>
    %cst_14 = arith.constant dense<0.000000e+00> : vector<1x256xf32>
    %16 = tpu.matmul %14, %3, %cst_14 {dimension_numbers = #tpu.dot_dimension_numbers<[1], [0], [0], [1], [0, 0, 1, 1], [], []>} : vector<1x64xf32>, vector<64x256xf32>, vector<1x256xf32> -> vector<1x256xf32>
    %c0_15 = arith.constant 0 : index
    %c0_16 = arith.constant 0 : index
    %17 = vector.load %arg6[%c0_15, %c0_16] : memref<8x256xf32, #tpu.memory_space<vmem>>, vector<1x256xf32>
    %18 = arith.addf %16, %17 : vector<1x256xf32>
    %19 = math.tanh %18 : vector<1x256xf32>
    %20 = vector.extract_strided_slice %19 {offsets = [0, 0], sizes = [1, 64], strides = [1, 1]} : vector<1x256xf32> to vector<1x64xf32>
    %cst_17 = arith.constant 5.000000e-01 : f32
    %21 = vector.broadcast %cst_17 : f32 to vector<1x64xf32>
    %22 = arith.mulf %21, %20 : vector<1x64xf32>
    %cst_18 = arith.constant 5.000000e-01 : f32
    %23 = vector.broadcast %cst_18 : f32 to vector<1x64xf32>
    %24 = arith.addf %22, %23 : vector<1x64xf32>
    %25 = vector.extract_strided_slice %19 {offsets = [0, 64], sizes = [1, 64], strides = [1, 1]} : vector<1x256xf32> to vector<1x64xf32>
    %cst_19 = arith.constant 5.000000e-01 : f32
    %26 = vector.broadcast %cst_19 : f32 to vector<1x64xf32>
    %27 = arith.mulf %26, %25 : vector<1x64xf32>
    %cst_20 = arith.constant 5.000000e-01 : f32
    %28 = vector.broadcast %cst_20 : f32 to vector<1x64xf32>
    %29 = arith.addf %27, %28 : vector<1x64xf32>
    %30 = vector.extract_strided_slice %19 {offsets = [0, 128], sizes = [1, 64], strides = [1, 1]} : vector<1x256xf32> to vector<1x64xf32>
    %31 = vector.extract_strided_slice %19 {offsets = [0, 192], sizes = [1, 64], strides = [1, 1]} : vector<1x256xf32> to vector<1x64xf32>
    %cst_21 = arith.constant 5.000000e-01 : f32
    %32 = vector.broadcast %cst_21 : f32 to vector<1x64xf32>
    %33 = arith.mulf %32, %31 : vector<1x64xf32>
    %cst_22 = arith.constant 5.000000e-01 : f32
    %34 = vector.broadcast %cst_22 : f32 to vector<1x64xf32>
    %35 = arith.addf %33, %34 : vector<1x64xf32>
    %36 = arith.mulf %29, %15 : vector<1x64xf32>
    %37 = arith.mulf %24, %30 : vector<1x64xf32>
    %38 = arith.addf %36, %37 : vector<1x64xf32>
    %39 = math.tanh %38 : vector<1x64xf32>
    %40 = arith.mulf %35, %39 : vector<1x64xf32>
    %41 = arith.select %13, %40, %14 : vector<1x64xi1>, vector<1x64xf32>
    %42 = arith.select %13, %38, %15 : vector<1x64xi1>, vector<1x64xf32>
    %c1_i32 = arith.constant 1 : i32
    %cst_23 = arith.constant dense<0.000000e+00> : vector<1x256xf32>
    %43 = tpu.matmul %41, %3, %cst_23 {dimension_numbers = #tpu.dot_dimension_numbers<[1], [0], [0], [1], [0, 0, 1, 1], [], []>} : vector<1x64xf32>, vector<64x256xf32>, vector<1x256xf32> -> vector<1x256xf32>
    %44 = arith.index_cast %c1_i32 : i32 to index
    %c0_24 = arith.constant 0 : index
    %45 = vector.load %arg6[%44, %c0_24] : memref<8x256xf32, #tpu.memory_space<vmem>>, vector<1x256xf32>
    %46 = arith.addf %43, %45 : vector<1x256xf32>
    %47 = math.tanh %46 : vector<1x256xf32>
    %48 = vector.extract_strided_slice %47 {offsets = [0, 0], sizes = [1, 64], strides = [1, 1]} : vector<1x256xf32> to vector<1x64xf32>
    %cst_25 = arith.constant 5.000000e-01 : f32
    %49 = vector.broadcast %cst_25 : f32 to vector<1x64xf32>
    %50 = arith.mulf %49, %48 : vector<1x64xf32>
    %cst_26 = arith.constant 5.000000e-01 : f32
    %51 = vector.broadcast %cst_26 : f32 to vector<1x64xf32>
    %52 = arith.addf %50, %51 : vector<1x64xf32>
    %53 = vector.extract_strided_slice %47 {offsets = [0, 64], sizes = [1, 64], strides = [1, 1]} : vector<1x256xf32> to vector<1x64xf32>
    %cst_27 = arith.constant 5.000000e-01 : f32
    %54 = vector.broadcast %cst_27 : f32 to vector<1x64xf32>
    %55 = arith.mulf %54, %53 : vector<1x64xf32>
    %cst_28 = arith.constant 5.000000e-01 : f32
    %56 = vector.broadcast %cst_28 : f32 to vector<1x64xf32>
    %57 = arith.addf %55, %56 : vector<1x64xf32>
    %58 = vector.extract_strided_slice %47 {offsets = [0, 128], sizes = [1, 64], strides = [1, 1]} : vector<1x256xf32> to vector<1x64xf32>
    %59 = vector.extract_strided_slice %47 {offsets = [0, 192], sizes = [1, 64], strides = [1, 1]} : vector<1x256xf32> to vector<1x64xf32>
    %cst_29 = arith.constant 5.000000e-01 : f32
    %60 = vector.broadcast %cst_29 : f32 to vector<1x64xf32>
    %61 = arith.mulf %60, %59 : vector<1x64xf32>
    %cst_30 = arith.constant 5.000000e-01 : f32
    %62 = vector.broadcast %cst_30 : f32 to vector<1x64xf32>
    %63 = arith.addf %61, %62 : vector<1x64xf32>
    %64 = arith.mulf %57, %42 : vector<1x64xf32>
    %65 = arith.mulf %52, %58 : vector<1x64xf32>
    %66 = arith.addf %64, %65 : vector<1x64xf32>
    %67 = math.tanh %66 : vector<1x64xf32>
    %68 = arith.mulf %63, %67 : vector<1x64xf32>
    %c1_i32_31 = arith.constant 1 : i32
    %69 = arith.subi %c1_i32, %c1_i32_31 : i32
    %70 = arith.index_cast %69 : i32 to index
    %c0_32 = arith.constant 0 : index
    %71 = vector.load %arg5[%70, %c0_32] : memref<8x64xf32, #tpu.memory_space<vmem>>, vector<1x64xf32>
    tpu.vector_store %arg5[%70, %c0_32], %68 {strides = array<i32>} : memref<8x64xf32, #tpu.memory_space<vmem>>, vector<1x64xf32>,
    %c2_i32 = arith.constant 2 : i32
    %cst_33 = arith.constant dense<0.000000e+00> : vector<1x256xf32>
    %72 = tpu.matmul %68, %3, %cst_33 {dimension_numbers = #tpu.dot_dimension_numbers<[1], [0], [0], [1], [0, 0, 1, 1], [], []>} : vector<1x64xf32>, vector<64x256xf32>, vector<1x256xf32> -> vector<1x256xf32>
    %73 = arith.index_cast %c2_i32 : i32 to index
    %c0_34 = arith.constant 0 : index
    %74 = vector.load %arg6[%73, %c0_34] : memref<8x256xf32, #tpu.memory_space<vmem>>, vector<1x256xf32>
    %75 = arith.addf %72, %74 : vector<1x256xf32>
    %76 = math.tanh %75 : vector<1x256xf32>
    %77 = vector.extract_strided_slice %76 {offsets = [0, 0], sizes = [1, 64], strides = [1, 1]} : vector<1x256xf32> to vector<1x64xf32>
    %cst_35 = arith.constant 5.000000e-01 : f32
    %78 = vector.broadcast %cst_35 : f32 to vector<1x64xf32>
    %79 = arith.mulf %78, %77 : vector<1x64xf32>
    %cst_36 = arith.constant 5.000000e-01 : f32
    %80 = vector.broadcast %cst_36 : f32 to vector<1x64xf32>
    %81 = arith.addf %79, %80 : vector<1x64xf32>
    %82 = vector.extract_strided_slice %76 {offsets = [0, 64], sizes = [1, 64], strides = [1, 1]} : vector<1x256xf32> to vector<1x64xf32>
    %cst_37 = arith.constant 5.000000e-01 : f32
    %83 = vector.broadcast %cst_37 : f32 to vector<1x64xf32>
    %84 = arith.mulf %83, %82 : vector<1x64xf32>
    %cst_38 = arith.constant 5.000000e-01 : f32
    %85 = vector.broadcast %cst_38 : f32 to vector<1x64xf32>
    %86 = arith.addf %84, %85 : vector<1x64xf32>
    %87 = vector.extract_strided_slice %76 {offsets = [0, 128], sizes = [1, 64], strides = [1, 1]} : vector<1x256xf32> to vector<1x64xf32>
    %88 = vector.extract_strided_slice %76 {offsets = [0, 192], sizes = [1, 64], strides = [1, 1]} : vector<1x256xf32> to vector<1x64xf32>
    %cst_39 = arith.constant 5.000000e-01 : f32
    %89 = vector.broadcast %cst_39 : f32 to vector<1x64xf32>
    %90 = arith.mulf %89, %88 : vector<1x64xf32>
    %cst_40 = arith.constant 5.000000e-01 : f32
    %91 = vector.broadcast %cst_40 : f32 to vector<1x64xf32>
    %92 = arith.addf %90, %91 : vector<1x64xf32>
    %93 = arith.mulf %86, %66 : vector<1x64xf32>
    %94 = arith.mulf %81, %87 : vector<1x64xf32>
    %95 = arith.addf %93, %94 : vector<1x64xf32>
    %96 = math.tanh %95 : vector<1x64xf32>
    %97 = arith.mulf %92, %96 : vector<1x64xf32>
    %c1_i32_41 = arith.constant 1 : i32
    %98 = arith.subi %c2_i32, %c1_i32_41 : i32
    %99 = arith.index_cast %98 : i32 to index
    %c0_42 = arith.constant 0 : index
    %100 = vector.load %arg5[%99, %c0_42] : memref<8x64xf32, #tpu.memory_space<vmem>>, vector<1x64xf32>
    tpu.vector_store %arg5[%99, %c0_42], %97 {strides = array<i32>} : memref<8x64xf32, #tpu.memory_space<vmem>>, vector<1x64xf32>,
    %c3_i32 = arith.constant 3 : i32
    %cst_43 = arith.constant dense<0.000000e+00> : vector<1x256xf32>
    %101 = tpu.matmul %97, %3, %cst_43 {dimension_numbers = #tpu.dot_dimension_numbers<[1], [0], [0], [1], [0, 0, 1, 1], [], []>} : vector<1x64xf32>, vector<64x256xf32>, vector<1x256xf32> -> vector<1x256xf32>
    %102 = arith.index_cast %c3_i32 : i32 to index
    %c0_44 = arith.constant 0 : index
    %103 = vector.load %arg6[%102, %c0_44] : memref<8x256xf32, #tpu.memory_space<vmem>>, vector<1x256xf32>
    %104 = arith.addf %101, %103 : vector<1x256xf32>
    %105 = math.tanh %104 : vector<1x256xf32>
    %106 = vector.extract_strided_slice %105 {offsets = [0, 0], sizes = [1, 64], strides = [1, 1]} : vector<1x256xf32> to vector<1x64xf32>
    %cst_45 = arith.constant 5.000000e-01 : f32
    %107 = vector.broadcast %cst_45 : f32 to vector<1x64xf32>
    %108 = arith.mulf %107, %106 : vector<1x64xf32>
    %cst_46 = arith.constant 5.000000e-01 : f32
    %109 = vector.broadcast %cst_46 : f32 to vector<1x64xf32>
    %110 = arith.addf %108, %109 : vector<1x64xf32>
    %111 = vector.extract_strided_slice %105 {offsets = [0, 64], sizes = [1, 64], strides = [1, 1]} : vector<1x256xf32> to vector<1x64xf32>
    %cst_47 = arith.constant 5.000000e-01 : f32
    %112 = vector.broadcast %cst_47 : f32 to vector<1x64xf32>
    %113 = arith.mulf %112, %111 : vector<1x64xf32>
    %cst_48 = arith.constant 5.000000e-01 : f32
    %114 = vector.broadcast %cst_48 : f32 to vector<1x64xf32>
    %115 = arith.addf %113, %114 : vector<1x64xf32>
    %116 = vector.extract_strided_slice %105 {offsets = [0, 128], sizes = [1, 64], strides = [1, 1]} : vector<1x256xf32> to vector<1x64xf32>
    %117 = vector.extract_strided_slice %105 {offsets = [0, 192], sizes = [1, 64], strides = [1, 1]} : vector<1x256xf32> to vector<1x64xf32>
    %cst_49 = arith.constant 5.000000e-01 : f32
    %118 = vector.broadcast %cst_49 : f32 to vector<1x64xf32>
    %119 = arith.mulf %118, %117 : vector<1x64xf32>
    %cst_50 = arith.constant 5.000000e-01 : f32
    %120 = vector.broadcast %cst_50 : f32 to vector<1x64xf32>
    %121 = arith.addf %119, %120 : vector<1x64xf32>
    %122 = arith.mulf %115, %95 : vector<1x64xf32>
    %123 = arith.mulf %110, %116 : vector<1x64xf32>
    %124 = arith.addf %122, %123 : vector<1x64xf32>
    %125 = math.tanh %124 : vector<1x64xf32>
    %126 = arith.mulf %121, %125 : vector<1x64xf32>
    %c1_i32_51 = arith.constant 1 : i32
    %127 = arith.subi %c3_i32, %c1_i32_51 : i32
    %128 = arith.index_cast %127 : i32 to index
    %c0_52 = arith.constant 0 : index
    %129 = vector.load %arg5[%128, %c0_52] : memref<8x64xf32, #tpu.memory_space<vmem>>, vector<1x64xf32>
    tpu.vector_store %arg5[%128, %c0_52], %126 {strides = array<i32>} : memref<8x64xf32, #tpu.memory_space<vmem>>, vector<1x64xf32>,
    %c4_i32 = arith.constant 4 : i32
    %cst_53 = arith.constant dense<0.000000e+00> : vector<1x256xf32>
    %130 = tpu.matmul %126, %3, %cst_53 {dimension_numbers = #tpu.dot_dimension_numbers<[1], [0], [0], [1], [0, 0, 1, 1], [], []>} : vector<1x64xf32>, vector<64x256xf32>, vector<1x256xf32> -> vector<1x256xf32>
    %131 = arith.index_cast %c4_i32 : i32 to index
    %c0_54 = arith.constant 0 : index
    %132 = vector.load %arg6[%131, %c0_54] : memref<8x256xf32, #tpu.memory_space<vmem>>, vector<1x256xf32>
    %133 = arith.addf %130, %132 : vector<1x256xf32>
    %134 = math.tanh %133 : vector<1x256xf32>
    %135 = vector.extract_strided_slice %134 {offsets = [0, 0], sizes = [1, 64], strides = [1, 1]} : vector<1x256xf32> to vector<1x64xf32>
    %cst_55 = arith.constant 5.000000e-01 : f32
    %136 = vector.broadcast %cst_55 : f32 to vector<1x64xf32>
    %137 = arith.mulf %136, %135 : vector<1x64xf32>
    %cst_56 = arith.constant 5.000000e-01 : f32
    %138 = vector.broadcast %cst_56 : f32 to vector<1x64xf32>
    %139 = arith.addf %137, %138 : vector<1x64xf32>
    %140 = vector.extract_strided_slice %134 {offsets = [0, 64], sizes = [1, 64], strides = [1, 1]} : vector<1x256xf32> to vector<1x64xf32>
    %cst_57 = arith.constant 5.000000e-01 : f32
    %141 = vector.broadcast %cst_57 : f32 to vector<1x64xf32>
    %142 = arith.mulf %141, %140 : vector<1x64xf32>
    %cst_58 = arith.constant 5.000000e-01 : f32
    %143 = vector.broadcast %cst_58 : f32 to vector<1x64xf32>
    %144 = arith.addf %142, %143 : vector<1x64xf32>
    %145 = vector.extract_strided_slice %134 {offsets = [0, 128], sizes = [1, 64], strides = [1, 1]} : vector<1x256xf32> to vector<1x64xf32>
    %146 = vector.extract_strided_slice %134 {offsets = [0, 192], sizes = [1, 64], strides = [1, 1]} : vector<1x256xf32> to vector<1x64xf32>
    %cst_59 = arith.constant 5.000000e-01 : f32
    %147 = vector.broadcast %cst_59 : f32 to vector<1x64xf32>
    %148 = arith.mulf %147, %146 : vector<1x64xf32>
    %cst_60 = arith.constant 5.000000e-01 : f32
    %149 = vector.broadcast %cst_60 : f32 to vector<1x64xf32>
    %150 = arith.addf %148, %149 : vector<1x64xf32>
    %151 = arith.mulf %144, %124 : vector<1x64xf32>
    %152 = arith.mulf %139, %145 : vector<1x64xf32>
    %153 = arith.addf %151, %152 : vector<1x64xf32>
    %154 = math.tanh %153 : vector<1x64xf32>
    %155 = arith.mulf %150, %154 : vector<1x64xf32>
    %c1_i32_61 = arith.constant 1 : i32
    %156 = arith.subi %c4_i32, %c1_i32_61 : i32
    %157 = arith.index_cast %156 : i32 to index
    %c0_62 = arith.constant 0 : index
    %158 = vector.load %arg5[%157, %c0_62] : memref<8x64xf32, #tpu.memory_space<vmem>>, vector<1x64xf32>
    tpu.vector_store %arg5[%157, %c0_62], %155 {strides = array<i32>} : memref<8x64xf32, #tpu.memory_space<vmem>>, vector<1x64xf32>,
    %c5_i32 = arith.constant 5 : i32
    %cst_63 = arith.constant dense<0.000000e+00> : vector<1x256xf32>
    %159 = tpu.matmul %155, %3, %cst_63 {dimension_numbers = #tpu.dot_dimension_numbers<[1], [0], [0], [1], [0, 0, 1, 1], [], []>} : vector<1x64xf32>, vector<64x256xf32>, vector<1x256xf32> -> vector<1x256xf32>
    %160 = arith.index_cast %c5_i32 : i32 to index
    %c0_64 = arith.constant 0 : index
    %161 = vector.load %arg6[%160, %c0_64] : memref<8x256xf32, #tpu.memory_space<vmem>>, vector<1x256xf32>
    %162 = arith.addf %159, %161 : vector<1x256xf32>
    %163 = math.tanh %162 : vector<1x256xf32>
    %164 = vector.extract_strided_slice %163 {offsets = [0, 0], sizes = [1, 64], strides = [1, 1]} : vector<1x256xf32> to vector<1x64xf32>
    %cst_65 = arith.constant 5.000000e-01 : f32
    %165 = vector.broadcast %cst_65 : f32 to vector<1x64xf32>
    %166 = arith.mulf %165, %164 : vector<1x64xf32>
    %cst_66 = arith.constant 5.000000e-01 : f32
    %167 = vector.broadcast %cst_66 : f32 to vector<1x64xf32>
    %168 = arith.addf %166, %167 : vector<1x64xf32>
    %169 = vector.extract_strided_slice %163 {offsets = [0, 64], sizes = [1, 64], strides = [1, 1]} : vector<1x256xf32> to vector<1x64xf32>
    %cst_67 = arith.constant 5.000000e-01 : f32
    %170 = vector.broadcast %cst_67 : f32 to vector<1x64xf32>
    %171 = arith.mulf %170, %169 : vector<1x64xf32>
    %cst_68 = arith.constant 5.000000e-01 : f32
    %172 = vector.broadcast %cst_68 : f32 to vector<1x64xf32>
    %173 = arith.addf %171, %172 : vector<1x64xf32>
    %174 = vector.extract_strided_slice %163 {offsets = [0, 128], sizes = [1, 64], strides = [1, 1]} : vector<1x256xf32> to vector<1x64xf32>
    %175 = vector.extract_strided_slice %163 {offsets = [0, 192], sizes = [1, 64], strides = [1, 1]} : vector<1x256xf32> to vector<1x64xf32>
    %cst_69 = arith.constant 5.000000e-01 : f32
    %176 = vector.broadcast %cst_69 : f32 to vector<1x64xf32>
    %177 = arith.mulf %176, %175 : vector<1x64xf32>
    %cst_70 = arith.constant 5.000000e-01 : f32
    %178 = vector.broadcast %cst_70 : f32 to vector<1x64xf32>
    %179 = arith.addf %177, %178 : vector<1x64xf32>
    %180 = arith.mulf %173, %153 : vector<1x64xf32>
    %181 = arith.mulf %168, %174 : vector<1x64xf32>
    %182 = arith.addf %180, %181 : vector<1x64xf32>
    %183 = math.tanh %182 : vector<1x64xf32>
    %184 = arith.mulf %179, %183 : vector<1x64xf32>
    %c1_i32_71 = arith.constant 1 : i32
    %185 = arith.subi %c5_i32, %c1_i32_71 : i32
    %186 = arith.index_cast %185 : i32 to index
    %c0_72 = arith.constant 0 : index
    %187 = vector.load %arg5[%186, %c0_72] : memref<8x64xf32, #tpu.memory_space<vmem>>, vector<1x64xf32>
    tpu.vector_store %arg5[%186, %c0_72], %184 {strides = array<i32>} : memref<8x64xf32, #tpu.memory_space<vmem>>, vector<1x64xf32>,
    %c6_i32 = arith.constant 6 : i32
    %cst_73 = arith.constant dense<0.000000e+00> : vector<1x256xf32>
    %188 = tpu.matmul %184, %3, %cst_73 {dimension_numbers = #tpu.dot_dimension_numbers<[1], [0], [0], [1], [0, 0, 1, 1], [], []>} : vector<1x64xf32>, vector<64x256xf32>, vector<1x256xf32> -> vector<1x256xf32>
    %189 = arith.index_cast %c6_i32 : i32 to index
    %c0_74 = arith.constant 0 : index
    %190 = vector.load %arg6[%189, %c0_74] : memref<8x256xf32, #tpu.memory_space<vmem>>, vector<1x256xf32>
    %191 = arith.addf %188, %190 : vector<1x256xf32>
    %192 = math.tanh %191 : vector<1x256xf32>
    %193 = vector.extract_strided_slice %192 {offsets = [0, 0], sizes = [1, 64], strides = [1, 1]} : vector<1x256xf32> to vector<1x64xf32>
    %cst_75 = arith.constant 5.000000e-01 : f32
    %194 = vector.broadcast %cst_75 : f32 to vector<1x64xf32>
    %195 = arith.mulf %194, %193 : vector<1x64xf32>
    %cst_76 = arith.constant 5.000000e-01 : f32
    %196 = vector.broadcast %cst_76 : f32 to vector<1x64xf32>
    %197 = arith.addf %195, %196 : vector<1x64xf32>
    %198 = vector.extract_strided_slice %192 {offsets = [0, 64], sizes = [1, 64], strides = [1, 1]} : vector<1x256xf32> to vector<1x64xf32>
    %cst_77 = arith.constant 5.000000e-01 : f32
    %199 = vector.broadcast %cst_77 : f32 to vector<1x64xf32>
    %200 = arith.mulf %199, %198 : vector<1x64xf32>
    %cst_78 = arith.constant 5.000000e-01 : f32
    %201 = vector.broadcast %cst_78 : f32 to vector<1x64xf32>
    %202 = arith.addf %200, %201 : vector<1x64xf32>
    %203 = vector.extract_strided_slice %192 {offsets = [0, 128], sizes = [1, 64], strides = [1, 1]} : vector<1x256xf32> to vector<1x64xf32>
    %204 = vector.extract_strided_slice %192 {offsets = [0, 192], sizes = [1, 64], strides = [1, 1]} : vector<1x256xf32> to vector<1x64xf32>
    %cst_79 = arith.constant 5.000000e-01 : f32
    %205 = vector.broadcast %cst_79 : f32 to vector<1x64xf32>
    %206 = arith.mulf %205, %204 : vector<1x64xf32>
    %cst_80 = arith.constant 5.000000e-01 : f32
    %207 = vector.broadcast %cst_80 : f32 to vector<1x64xf32>
    %208 = arith.addf %206, %207 : vector<1x64xf32>
    %209 = arith.mulf %202, %182 : vector<1x64xf32>
    %210 = arith.mulf %197, %203 : vector<1x64xf32>
    %211 = arith.addf %209, %210 : vector<1x64xf32>
    %212 = math.tanh %211 : vector<1x64xf32>
    %213 = arith.mulf %208, %212 : vector<1x64xf32>
    %c1_i32_81 = arith.constant 1 : i32
    %214 = arith.subi %c6_i32, %c1_i32_81 : i32
    %215 = arith.index_cast %214 : i32 to index
    %c0_82 = arith.constant 0 : index
    %216 = vector.load %arg5[%215, %c0_82] : memref<8x64xf32, #tpu.memory_space<vmem>>, vector<1x64xf32>
    tpu.vector_store %arg5[%215, %c0_82], %213 {strides = array<i32>} : memref<8x64xf32, #tpu.memory_space<vmem>>, vector<1x64xf32>,
    %c7_i32 = arith.constant 7 : i32
    %cst_83 = arith.constant dense<0.000000e+00> : vector<1x256xf32>
    %217 = tpu.matmul %213, %3, %cst_83 {dimension_numbers = #tpu.dot_dimension_numbers<[1], [0], [0], [1], [0, 0, 1, 1], [], []>} : vector<1x64xf32>, vector<64x256xf32>, vector<1x256xf32> -> vector<1x256xf32>
    %218 = arith.index_cast %c7_i32 : i32 to index
    %c0_84 = arith.constant 0 : index
    %219 = vector.load %arg6[%218, %c0_84] : memref<8x256xf32, #tpu.memory_space<vmem>>, vector<1x256xf32>
    %220 = arith.addf %217, %219 : vector<1x256xf32>
    %221 = math.tanh %220 : vector<1x256xf32>
    %222 = vector.extract_strided_slice %221 {offsets = [0, 0], sizes = [1, 64], strides = [1, 1]} : vector<1x256xf32> to vector<1x64xf32>
    %cst_85 = arith.constant 5.000000e-01 : f32
    %223 = vector.broadcast %cst_85 : f32 to vector<1x64xf32>
    %224 = arith.mulf %223, %222 : vector<1x64xf32>
    %cst_86 = arith.constant 5.000000e-01 : f32
    %225 = vector.broadcast %cst_86 : f32 to vector<1x64xf32>
    %226 = arith.addf %224, %225 : vector<1x64xf32>
    %227 = vector.extract_strided_slice %221 {offsets = [0, 64], sizes = [1, 64], strides = [1, 1]} : vector<1x256xf32> to vector<1x64xf32>
    %cst_87 = arith.constant 5.000000e-01 : f32
    %228 = vector.broadcast %cst_87 : f32 to vector<1x64xf32>
    %229 = arith.mulf %228, %227 : vector<1x64xf32>
    %cst_88 = arith.constant 5.000000e-01 : f32
    %230 = vector.broadcast %cst_88 : f32 to vector<1x64xf32>
    %231 = arith.addf %229, %230 : vector<1x64xf32>
    %232 = vector.extract_strided_slice %221 {offsets = [0, 128], sizes = [1, 64], strides = [1, 1]} : vector<1x256xf32> to vector<1x64xf32>
    %233 = vector.extract_strided_slice %221 {offsets = [0, 192], sizes = [1, 64], strides = [1, 1]} : vector<1x256xf32> to vector<1x64xf32>
    %cst_89 = arith.constant 5.000000e-01 : f32
    %234 = vector.broadcast %cst_89 : f32 to vector<1x64xf32>
    %235 = arith.mulf %234, %233 : vector<1x64xf32>
    %cst_90 = arith.constant 5.000000e-01 : f32
    %236 = vector.broadcast %cst_90 : f32 to vector<1x64xf32>
    %237 = arith.addf %235, %236 : vector<1x64xf32>
    %238 = arith.mulf %231, %211 : vector<1x64xf32>
    %239 = arith.mulf %226, %232 : vector<1x64xf32>
    %240 = arith.addf %238, %239 : vector<1x64xf32>
    %241 = math.tanh %240 : vector<1x64xf32>
    %242 = arith.mulf %237, %241 : vector<1x64xf32>
    %c1_i32_91 = arith.constant 1 : i32
    %243 = arith.subi %c7_i32, %c1_i32_91 : i32
    %244 = arith.index_cast %243 : i32 to index
    %c0_92 = arith.constant 0 : index
    %245 = vector.load %arg5[%244, %c0_92] : memref<8x64xf32, #tpu.memory_space<vmem>>, vector<1x64xf32>
    tpu.vector_store %arg5[%244, %c0_92], %242 {strides = array<i32>} : memref<8x64xf32, #tpu.memory_space<vmem>>, vector<1x64xf32>,
    %c7_i32_93 = arith.constant 7 : i32
    %cst_94 = arith.constant dense<0.000000e+00> : vector<1x256xf32>
    %246 = tpu.matmul %242, %3, %cst_94 {dimension_numbers = #tpu.dot_dimension_numbers<[1], [0], [0], [1], [0, 0, 1, 1], [], []>} : vector<1x64xf32>, vector<64x256xf32>, vector<1x256xf32> -> vector<1x256xf32>
    %247 = arith.addf %246, %4 : vector<1x256xf32>
    %248 = math.tanh %247 : vector<1x256xf32>
    %249 = vector.extract_strided_slice %248 {offsets = [0, 0], sizes = [1, 64], strides = [1, 1]} : vector<1x256xf32> to vector<1x64xf32>
    %cst_95 = arith.constant 5.000000e-01 : f32
    %250 = vector.broadcast %cst_95 : f32 to vector<1x64xf32>
    %251 = arith.mulf %250, %249 : vector<1x64xf32>
    %cst_96 = arith.constant 5.000000e-01 : f32
    %252 = vector.broadcast %cst_96 : f32 to vector<1x64xf32>
    %253 = arith.addf %251, %252 : vector<1x64xf32>
    %254 = vector.extract_strided_slice %248 {offsets = [0, 64], sizes = [1, 64], strides = [1, 1]} : vector<1x256xf32> to vector<1x64xf32>
    %cst_97 = arith.constant 5.000000e-01 : f32
    %255 = vector.broadcast %cst_97 : f32 to vector<1x64xf32>
    %256 = arith.mulf %255, %254 : vector<1x64xf32>
    %cst_98 = arith.constant 5.000000e-01 : f32
    %257 = vector.broadcast %cst_98 : f32 to vector<1x64xf32>
    %258 = arith.addf %256, %257 : vector<1x64xf32>
    %259 = vector.extract_strided_slice %248 {offsets = [0, 128], sizes = [1, 64], strides = [1, 1]} : vector<1x256xf32> to vector<1x64xf32>
    %260 = vector.extract_strided_slice %248 {offsets = [0, 192], sizes = [1, 64], strides = [1, 1]} : vector<1x256xf32> to vector<1x64xf32>
    %cst_99 = arith.constant 5.000000e-01 : f32
    %261 = vector.broadcast %cst_99 : f32 to vector<1x64xf32>
    %262 = arith.mulf %261, %260 : vector<1x64xf32>
    %cst_100 = arith.constant 5.000000e-01 : f32
    %263 = vector.broadcast %cst_100 : f32 to vector<1x64xf32>
    %264 = arith.addf %262, %263 : vector<1x64xf32>
    %265 = arith.mulf %258, %240 : vector<1x64xf32>
    %266 = arith.mulf %253, %259 : vector<1x64xf32>
    %267 = arith.addf %265, %266 : vector<1x64xf32>
    %268 = math.tanh %267 : vector<1x64xf32>
    %269 = arith.mulf %264, %268 : vector<1x64xf32>
    %270 = arith.select %13, %242, %269 : vector<1x64xi1>, vector<1x64xf32>
    %271 = arith.select %13, %240, %267 : vector<1x64xi1>, vector<1x64xf32>
    %c7 = arith.constant 7 : index
    %c0_101 = arith.constant 0 : index
    %272 = vector.load %arg5[%c7, %c0_101] : memref<8x64xf32, #tpu.memory_space<vmem>>, vector<1x64xf32>
    tpu.vector_store %arg5[%c7, %c0_101], %270 {strides = array<i32>} : memref<8x64xf32, #tpu.memory_space<vmem>>, vector<1x64xf32>,
    %c0_102 = arith.constant 0 : index
    %c0_103 = arith.constant 0 : index
    %273 = vector.load %arg7[%c0_102, %c0_103] : memref<1x64xf32, #tpu.memory_space<vmem>>, vector<1x64xf32>
    tpu.vector_store %arg7[%c0_102, %c0_103], %270 {strides = array<i32>} : memref<1x64xf32, #tpu.memory_space<vmem>>, vector<1x64xf32>,
    %c0_104 = arith.constant 0 : index
    %c0_105 = arith.constant 0 : index
    %274 = vector.load %arg8[%c0_104, %c0_105] : memref<1x64xf32, #tpu.memory_space<vmem>>, vector<1x64xf32>
    tpu.vector_store %arg8[%c0_104, %c0_105], %271 {strides = array<i32>} : memref<1x64xf32, #tpu.memory_space<vmem>>, vector<1x64xf32>,
    return
  }
  func.func @transform_0(%arg0: i32) -> (i32, i32) {
    %c0_i32 = arith.constant 0 : i32
    %c0_i32_0 = arith.constant 0 : i32
    return %arg0, %c0_i32 : i32, i32
  }
  func.func @transform_1(%arg0: i32) -> (i32, i32) {
    %c0_i32 = arith.constant 0 : i32
    %c0_i32_0 = arith.constant 0 : i32
    %c0_i32_1 = arith.constant 0 : i32
    return %c0_i32, %c0_i32_0 : i32, i32
  }
  func.func @transform_2(%arg0: i32) -> (i32, i32) {
    %c0_i32 = arith.constant 0 : i32
    %c0_i32_0 = arith.constant 0 : i32
    %c0_i32_1 = arith.constant 0 : i32
    return %c0_i32, %c0_i32_0 : i32, i32
  }
  func.func @transform_3(%arg0: i32) -> (i32, i32) {
    %c0_i32 = arith.constant 0 : i32
    %c0_i32_0 = arith.constant 0 : i32
    %c0_i32_1 = arith.constant 0 : i32
    return %c0_i32, %c0_i32_0 : i32, i32
  }
  func.func @transform_4(%arg0: i32) -> (i32, i32) {
    %c0_i32 = arith.constant 0 : i32
    %c0_i32_0 = arith.constant 0 : i32
    return %arg0, %c0_i32 : i32, i32
  }
}

</mosaic_0001>

<llo_original>
// kernel: lstm_forward.1
$region0: #{lstm_forward.1}
  #allocation0 [shape = 'u32[]', space=smem, size = 0x4, offset = 0x4, fixed_abs, tag = 'smem constant byte address 0x4 - core index']
  #allocation1 [shape = 'u32[72,128]{1,0:T(1,128)}', space=vmem, size = 0x9000, scoped, tag = 'internal scratch']
  #allocation2 [shape = 'f32[8,256]{1,0:T(8,128)}', space=vmem, size = 0x2000, scoped, tag = 'scratch operand']
  #allocation3 [shape = 'f32[1,64]{1,0:T(1,128)}', space=vmem, size = 0x200, scoped, tag = 'scratch operand']
  #allocation4 [shape = 'f32[1,64]{1,0:T(1,128)}', space=vmem, size = 0x200, scoped, tag = 'scratch operand']
  %s0 = inlined_call_operand.vmem [shape: f32[8,16], index: 0, kind: input, shape index: {}]
  %s1 = inlined_call_operand.vmem [shape: f32[16,256], index: 1, kind: input, shape index: {}]
  %s2 = inlined_call_operand.vmem [shape: f32[64,256], index: 2, kind: input, shape index: {}]
  %s3 = inlined_call_operand.vmem [shape: f32[1,256], index: 3, kind: input, shape index: {}]
  %s4 = inlined_call_operand.vmem [shape: f32[8,64], index: 4, kind: output, shape index: {}]
  %s5 = sld [smem:[#allocation0]]
  $region30: #{lstm_forward.1} parent=0
    _
  %s7 = ssub.s32 1, %s5
  %s8 = scalar_select 0, %s7, %s5
  // Predicated region
  $region2: #{lstm_forward.1} parent=0 // pred_check
    _
  $region3: #{lstm_forward.1} parent=0 // pred_check_branch
    %10 = sbr.rel (0) target = $region5
  $region4: #{lstm_forward.1} parent=0 // pred_region
    _
  $region5: #{lstm_forward.1} parent=0 // pred_fallthru
    _
  // Predicated region
  $region6: #{lstm_forward.1} parent=0 // pred_check
    _
  $region7: #{lstm_forward.1} parent=0 // pred_check_branch
    %12 = sbr.rel (0) target = $region9
  $region8: #{lstm_forward.1} parent=0 // pred_region
    _
  $region9: #{lstm_forward.1} parent=0 // pred_fallthru
    _
  // Predicated region
  $region10: #{lstm_forward.1} parent=0 // pred_check
    _
  $region11: #{lstm_forward.1} parent=0 // pred_check_branch
    %14 = sbr.rel (0) target = $region13
  $region12: #{lstm_forward.1} parent=0 // pred_region
    _
  $region13: #{lstm_forward.1} parent=0 // pred_fallthru
    _
  // Predicated region
  $region14: #{lstm_forward.1} parent=0 // pred_check
    _
  $region15: #{lstm_forward.1} parent=0 // pred_check_branch
    %16 = sbr.rel (0) target = $region17
  $region16: #{lstm_forward.1} parent=0 // pred_region
    _
  $region17: #{lstm_forward.1} parent=0 // pred_fallthru
    _
  %p17 = scmp.eq.s32.totalorder 0, 0
  // Predicated region
  $region18: #{lstm_forward.1} parent=0 // pred_check
    %p18 = pneg %p17
  $region19: #{lstm_forward.1} parent=0 // pred_check_branch
    %20 = sbr.rel (%p18) target = $region21
  $region20: #{lstm_forward.1} parent=0 // pred_region
    %vm21 = vcmask 516096
    %22 = vst.msk [vmem:[#allocation3] sm:$0x1] %vm21, 0.0
    %23 = vst.msk [vmem:[#allocation4] sm:$0x1] %vm21, 0.0
  $region21: #{lstm_forward.1} parent=0 // pred_fallthru
    _
  %v24 = vld [vmem:[%s2] sm:$0xff]
  %v25 = vld [vmem:[%s2 + $0x8] sm:$0xff]
  %v26 = vld [vmem:[%s2 + $0x10] sm:$0xff]
  %v27 = vld [vmem:[%s2 + $0x18] sm:$0xff]
  %v28 = vld [vmem:[%s2 + $0x20] sm:$0xff]
  %v29 = vld [vmem:[%s2 + $0x28] sm:$0xff]
  %v30 = vld [vmem:[%s2 + $0x30] sm:$0xff]
  %v31 = vld [vmem:[%s2 + $0x38] sm:$0xff]
  %v32 = vld [vmem:[%s2 + $0x40] sm:$0xff]
  %v33 = vld [vmem:[%s2 + $0x48] sm:$0xff]
  %v34 = vld [vmem:[%s2 + $0x50] sm:$0xff]
  %v35 = vld [vmem:[%s2 + $0x58] sm:$0xff]
  %v36 = vld [vmem:[%s2 + $0x60] sm:$0xff]
  %v37 = vld [vmem:[%s2 + $0x68] sm:$0xff]
  %v38 = vld [vmem:[%s2 + $0x70] sm:$0xff]
  %v39 = vld [vmem:[%s2 + $0x78] sm:$0xff]
  %v40 = vld [vmem:[%s3] sm:$0x3]
  %v41 = vld [vmem:[%s0] sm:$0xff]
  %v42 = vld [vmem:[%s1] sm:$0xff]
  %v43 = vld [vmem:[%s1 + $0x8] sm:$0xff]
  %v44 = vld [vmem:[%s1 + $0x10] sm:$0xff]
  %v45 = vld [vmem:[%s1 + $0x18] sm:$0xff]
  %v47 = vperm.slane %v40, 0
  %v48 = vperm.slane %v40, 1
  %vm51 = vcmask 130048
  %v53 = vsel %vm51, %v41, 0
  %55 = vmatpush.msra.mxu0 0.0
  %56 = vmatpush.msra.mxu0 0.0
  %57 = vmatpush.msra.mxu0 0.0
  %58 = vmatpush.msra.mxu0 0.0
  %59 = vmatpush.msra.mxu0 0.0
  %60 = vmatpush.msra.mxu0 0.0
  %61 = vmatpush.msra.mxu0 0.0
  %62 = vmatpush.msra.mxu0 0.0
  %63 = vmatpush.msra.mxu0 0.0
  %64 = vmatpush.msra.mxu0 0.0
  %65 = vmatpush.msra.mxu0 0.0
  %66 = vmatpush.msra.mxu0 0.0
  %67 = vmatpush.msra.mxu0 0.0
  %68 = vmatpush.msra.mxu0 0.0
  %69 = vmatpush.msra.mxu0 %v44
  %70 = vmatpush.msra.mxu0 %v42
  %71 = vmatmul.f32.gmra.mxu0 %v53
  %v72 = vpop.f32.mrf.mxu0
  %v73 = vadd.f32 %v47, %v72
  %74 = vdwg.mxu0
  %75 = vmatpush.msra.mxu0 0.0
  %76 = vmatpush.msra.mxu0 0.0
  %77 = vmatpush.msra.mxu0 0.0
  %78 = vmatpush.msra.mxu0 0.0
  %79 = vmatpush.msra.mxu0 0.0
  %80 = vmatpush.msra.mxu0 0.0
  %81 = vmatpush.msra.mxu0 0.0
  %82 = vmatpush.msra.mxu0 0.0
  %83 = vmatpush.msra.mxu0 0.0
  %84 = vmatpush.msra.mxu0 0.0
  %85 = vmatpush.msra.mxu0 0.0
  %86 = vmatpush.msra.mxu0 0.0
  %87 = vmatpush.msra.mxu0 0.0
  %88 = vmatpush.msra.mxu0 0.0
  %89 = vmatpush.msra.mxu0 %v45
  %90 = vmatpush.msra.mxu0 %v43
  %91 = vmatmul.f32.gmra.mxu0 %v53
  %v92 = vpop.f32.mrf.mxu0
  %v93 = vadd.f32 %v48, %v92
  %94 = vdwg.mxu0
  %95 = vst [vmem:[#allocation2] sm:$0xff] %v73
  %96 = vst [vmem:[#allocation2 + $0x8] sm:$0xff] %v93
  %v97 = vlaneseq
  %v98 = vand.u32 %v97, 127
  %vm99 = vcmp.lt.s32.totalorder %v98, 32
  %v100 = vld [vmem:[#allocation3] sm:$0x1]
  %v101 = vld [vmem:[#allocation4] sm:$0x1]
  %v102 = vld [vmem:[#allocation2] ss:$8 sm:$0x3]
  %v104 = vperm.slane %v102, 0
  %v105 = vperm.slane %v102, 1
  %vm108 = vcmask 523264
  %v110 = vsel %vm108, %v100, 0
  %112 = vmatpush.msra.mxu0 0.0
  %113 = vmatpush.msra.mxu0 0.0
  %114 = vmatpush.msra.mxu0 0.0
  %115 = vmatpush.msra.mxu0 0.0
  %116 = vmatpush.msra.mxu0 0.0
  %117 = vmatpush.msra.mxu0 0.0
  %118 = vmatpush.msra.mxu0 0.0
  %119 = vmatpush.msra.mxu0 0.0
  %120 = vmatpush.msra.mxu0 %v38
  %121 = vmatpush.msra.mxu0 %v36
  %122 = vmatpush.msra.mxu0 %v34
  %123 = vmatpush.msra.mxu0 %v32
  %124 = vmatpush.msra.mxu0 %v30
  %125 = vmatpush.msra.mxu0 %v28
  %126 = vmatpush.msra.mxu0 %v26
  %127 = vmatpush.msra.mxu0 %v24
  %128 = vmatmul.f32.gmra.mxu0 %v110
  %v129 = vpop.f32.mrf.mxu0
  %v130 = vadd.f32 %v104, %v129
  %131 = vdwg.mxu0
  %132 = vmatpush.msra.mxu0 0.0
  %133 = vmatpush.msra.mxu0 0.0
  %134 = vmatpush.msra.mxu0 0.0
  %135 = vmatpush.msra.mxu0 0.0
  %136 = vmatpush.msra.mxu0 0.0
  %137 = vmatpush.msra.mxu0 0.0
  %138 = vmatpush.msra.mxu0 0.0
  %139 = vmatpush.msra.mxu0 0.0
  %140 = vmatpush.msra.mxu0 %v39
  %141 = vmatpush.msra.mxu0 %v37
  %142 = vmatpush.msra.mxu0 %v35
  %143 = vmatpush.msra.mxu0 %v33
  %144 = vmatpush.msra.mxu0 %v31
  %145 = vmatpush.msra.mxu0 %v29
  %146 = vmatpush.msra.mxu0 %v27
  %147 = vmatpush.msra.mxu0 %v25
  %148 = vmatmul.f32.gmra.mxu0 %v110
  %v149 = vpop.f32.mrf.mxu0
  %v150 = vadd.f32 %v105, %v149
  %151 = vdwg.mxu0
  %v152 = vtanh.pop %v130
  %v153 = vtanh.pop %v150
  %v154 = vmul.f32 %v152, 0.5
  %v155 = vadd.f32 %v154, 0.5
  %v156 = vmul.f32 %v153, 0.5
  %v157 = vadd.f32 %v156, 0.5
  %v159 = vperm.slane %v101, 0
  %160 = vrot.lane.b32.xlu0 %v159, 64
  %v161 = vpop.permute.xlu0 %160
  %v163 = vmul.f32 %v155, %v161
  %v164 = vmul.f32 %v155, %v153
  %166 = vrot.lane.b32.xlu0 %v164, 64
  %v167 = vpop.permute.xlu0 %166
  %v169 = vadd.f32 %v163, %v167
  %v170 = vtanh.pop %v169
  %v171 = vmul.f32 %v157, %v170
  %173 = vrot.lane.b32.xlu0 %v171, 64
  %v174 = vpop.permute.xlu0 %173
  %v176 = vsel %vm99, %v174, %v100
  %178 = vrot.lane.b32.xlu0 %v169, 64
  %v179 = vpop.permute.xlu0 %178
  %v181 = vsel %vm99, %v179, %v101
  %s182 = scalar_lea.vmem [#allocation2], 1
  %v183 = vld [vmem:[%s182] ss:$8 sm:$0x3]
  %v185 = vperm.slane %v183, 0
  %v186 = vperm.slane %v183, 1
  %v190 = vsel %vm108, %v176, 0
  %192 = vmatpush.msra.mxu0 0.0
  %193 = vmatpush.msra.mxu0 0.0
  %194 = vmatpush.msra.mxu0 0.0
  %195 = vmatpush.msra.mxu0 0.0
  %196 = vmatpush.msra.mxu0 0.0
  %197 = vmatpush.msra.mxu0 0.0
  %198 = vmatpush.msra.mxu0 0.0
  %199 = vmatpush.msra.mxu0 0.0
  %200 = vmatpush.msra.mxu0 %v38
  %201 = vmatpush.msra.mxu0 %v36
  %202 = vmatpush.msra.mxu0 %v34
  %203 = vmatpush.msra.mxu0 %v32
  %204 = vmatpush.msra.mxu0 %v30
  %205 = vmatpush.msra.mxu0 %v28
  %206 = vmatpush.msra.mxu0 %v26
  %207 = vmatpush.msra.mxu0 %v24
  %208 = vmatmul.f32.gmra.mxu0 %v190
  %v209 = vpop.f32.mrf.mxu0
  %v210 = vadd.f32 %v185, %v209
  %211 = vdwg.mxu0
  %212 = vmatpush.msra.mxu0 0.0
  %213 = vmatpush.msra.mxu0 0.0
  %214 = vmatpush.msra.mxu0 0.0
  %215 = vmatpush.msra.mxu0 0.0
  %216 = vmatpush.msra.mxu0 0.0
  %217 = vmatpush.msra.mxu0 0.0
  %218 = vmatpush.msra.mxu0 0.0
  %219 = vmatpush.msra.mxu0 0.0
  %220 = vmatpush.msra.mxu0 %v39
  %221 = vmatpush.msra.mxu0 %v37
  %222 = vmatpush.msra.mxu0 %v35
  %223 = vmatpush.msra.mxu0 %v33
  %224 = vmatpush.msra.mxu0 %v31
  %225 = vmatpush.msra.mxu0 %v29
  %226 = vmatpush.msra.mxu0 %v27
  %227 = vmatpush.msra.mxu0 %v25
  %228 = vmatmul.f32.gmra.mxu0 %v190
  %v229 = vpop.f32.mrf.mxu0
  %v230 = vadd.f32 %v186, %v229
  %231 = vdwg.mxu0
  %v232 = vtanh.pop %v210
  %v233 = vtanh.pop %v230
  %v234 = vmul.f32 %v232, 0.5
  %v235 = vadd.f32 %v234, 0.5
  %v236 = vmul.f32 %v233, 0.5
  %v237 = vadd.f32 %v236, 0.5
  %239 = vrot.lane.b32.xlu0 %v181, 64
  %v240 = vpop.permute.xlu0 %239
  %v242 = vmul.f32 %v235, %v240
  %v243 = vmul.f32 %v235, %v233
  %245 = vrot.lane.b32.xlu0 %v243, 64
  %v246 = vpop.permute.xlu0 %245
  %v248 = vadd.f32 %v242, %v246
  %v249 = vtanh.pop %v248
  %v250 = vmul.f32 %v237, %v249
  %252 = vrot.lane.b32.xlu0 %v250, 64
  %v253 = vpop.permute.xlu0 %252
  %vm255 = vcmask 516096
  %256 = vst.msk [vmem:[%s4] sm:$0x1] %vm255, %v253
  %s257 = scalar_lea.vmem [#allocation2], 2
  %v258 = vld [vmem:[%s257] ss:$8 sm:$0x3]
  %v260 = vperm.slane %v258, 0
  %v261 = vperm.slane %v258, 1
  %v264 = vsel %vm108, %v253, 0
  %266 = vmatpush.msra.mxu0 0.0
  %267 = vmatpush.msra.mxu0 0.0
  %268 = vmatpush.msra.mxu0 0.0
  %269 = vmatpush.msra.mxu0 0.0
  %270 = vmatpush.msra.mxu0 0.0
  %271 = vmatpush.msra.mxu0 0.0
  %272 = vmatpush.msra.mxu0 0.0
  %273 = vmatpush.msra.mxu0 0.0
  %274 = vmatpush.msra.mxu0 %v38
  %275 = vmatpush.msra.mxu0 %v36
  %276 = vmatpush.msra.mxu0 %v34
  %277 = vmatpush.msra.mxu0 %v32
  %278 = vmatpush.msra.mxu0 %v30
  %279 = vmatpush.msra.mxu0 %v28
  %280 = vmatpush.msra.mxu0 %v26
  %281 = vmatpush.msra.mxu0 %v24
  %282 = vmatmul.f32.gmra.mxu0 %v264
  %v283 = vpop.f32.mrf.mxu0
  %v284 = vadd.f32 %v260, %v283
  %285 = vdwg.mxu0
  %286 = vmatpush.msra.mxu0 0.0
  %287 = vmatpush.msra.mxu0 0.0
  %288 = vmatpush.msra.mxu0 0.0
  %289 = vmatpush.msra.mxu0 0.0
  %290 = vmatpush.msra.mxu0 0.0
  %291 = vmatpush.msra.mxu0 0.0
  %292 = vmatpush.msra.mxu0 0.0
  %293 = vmatpush.msra.mxu0 0.0
  %294 = vmatpush.msra.mxu0 %v39
  %295 = vmatpush.msra.mxu0 %v37
  %296 = vmatpush.msra.mxu0 %v35
  %297 = vmatpush.msra.mxu0 %v33
  %298 = vmatpush.msra.mxu0 %v31
  %299 = vmatpush.msra.mxu0 %v29
  %300 = vmatpush.msra.mxu0 %v27
  %301 = vmatpush.msra.mxu0 %v25
  %302 = vmatmul.f32.gmra.mxu0 %v264
  %v303 = vpop.f32.mrf.mxu0
  %v304 = vadd.f32 %v261, %v303
  %305 = vdwg.mxu0
  %v306 = vtanh.pop %v284
  %v307 = vtanh.pop %v304
  %v308 = vmul.f32 %v306, 0.5
  %v309 = vadd.f32 %v308, 0.5
  %v310 = vmul.f32 %v307, 0.5
  %v311 = vadd.f32 %v310, 0.5
  %v312 = vmul.f32 %v309, %v248
  %v313 = vmul.f32 %v309, %v307
  %315 = vrot.lane.b32.xlu0 %v313, 64
  %v316 = vpop.permute.xlu0 %315
  %v318 = vadd.f32 %v312, %v316
  %v319 = vtanh.pop %v318
  %v320 = vmul.f32 %v311, %v319
  %322 = vrot.lane.b32.xlu0 %v320, 64
  %v323 = vpop.permute.xlu0 %322
  %325 = vst.msk [vmem:[%s4 + $0x1] sm:$0x1] %vm255, %v323
  %s326 = scalar_lea.vmem [#allocation2], 3
  %v327 = vld [vmem:[%s326] ss:$8 sm:$0x3]
  %v329 = vperm.slane %v327, 0
  %v330 = vperm.slane %v327, 1
  %v333 = vsel %vm108, %v323, 0
  %335 = vmatpush.msra.mxu0 0.0
  %336 = vmatpush.msra.mxu0 0.0
  %337 = vmatpush.msra.mxu0 0.0
  %338 = vmatpush.msra.mxu0 0.0
  %339 = vmatpush.msra.mxu0 0.0
  %340 = vmatpush.msra.mxu0 0.0
  %341 = vmatpush.msra.mxu0 0.0
  %342 = vmatpush.msra.mxu0 0.0
  %343 = vmatpush.msra.mxu0 %v38
  %344 = vmatpush.msra.mxu0 %v36
  %345 = vmatpush.msra.mxu0 %v34
  %346 = vmatpush.msra.mxu0 %v32
  %347 = vmatpush.msra.mxu0 %v30
  %348 = vmatpush.msra.mxu0 %v28
  %349 = vmatpush.msra.mxu0 %v26
  %350 = vmatpush.msra.mxu0 %v24
  %351 = vmatmul.f32.gmra.mxu0 %v333
  %v352 = vpop.f32.mrf.mxu0
  %v353 = vadd.f32 %v329, %v352
  %354 = vdwg.mxu0
  %355 = vmatpush.msra.mxu0 0.0
  %356 = vmatpush.msra.mxu0 0.0
  %357 = vmatpush.msra.mxu0 0.0
  %358 = vmatpush.msra.mxu0 0.0
  %359 = vmatpush.msra.mxu0 0.0
  %360 = vmatpush.msra.mxu0 0.0
  %361 = vmatpush.msra.mxu0 0.0
  %362 = vmatpush.msra.mxu0 0.0
  %363 = vmatpush.msra.mxu0 %v39
  %364 = vmatpush.msra.mxu0 %v37
  %365 = vmatpush.msra.mxu0 %v35
  %366 = vmatpush.msra.mxu0 %v33
  %367 = vmatpush.msra.mxu0 %v31
  %368 = vmatpush.msra.mxu0 %v29
  %369 = vmatpush.msra.mxu0 %v27
  %370 = vmatpush.msra.mxu0 %v25
  %371 = vmatmul.f32.gmra.mxu0 %v333
  %v372 = vpop.f32.mrf.mxu0
  %v373 = vadd.f32 %v330, %v372
  %374 = vdwg.mxu0
  %v375 = vtanh.pop %v353
  %v376 = vtanh.pop %v373
  %v377 = vmul.f32 %v375, 0.5
  %v378 = vadd.f32 %v377, 0.5
  %v379 = vmul.f32 %v376, 0.5
  %v380 = vadd.f32 %v379, 0.5
  %v381 = vmul.f32 %v378, %v318
  %v382 = vmul.f32 %v378, %v376
  %384 = vrot.lane.b32.xlu0 %v382, 64
  %v385 = vpop.permute.xlu0 %384
  %v387 = vadd.f32 %v381, %v385
  %v388 = vtanh.pop %v387
  %v389 = vmul.f32 %v380, %v388
  %391 = vrot.lane.b32.xlu0 %v389, 64
  %v392 = vpop.permute.xlu0 %391
  %394 = vst.msk [vmem:[%s4 + $0x2] sm:$0x1] %vm255, %v392
  %s395 = scalar_lea.vmem [#allocation2], 4
  %v396 = vld [vmem:[%s395] ss:$8 sm:$0x3]
  %v398 = vperm.slane %v396, 0
  %v399 = vperm.slane %v396, 1
  %v402 = vsel %vm108, %v392, 0
  %404 = vmatpush.msra.mxu0 0.0
  %405 = vmatpush.msra.mxu0 0.0
  %406 = vmatpush.msra.mxu0 0.0
  %407 = vmatpush.msra.mxu0 0.0
  %408 = vmatpush.msra.mxu0 0.0
  %409 = vmatpush.msra.mxu0 0.0
  %410 = vmatpush.msra.mxu0 0.0
  %411 = vmatpush.msra.mxu0 0.0
  %412 = vmatpush.msra.mxu0 %v38
  %413 = vmatpush.msra.mxu0 %v36
  %414 = vmatpush.msra.mxu0 %v34
  %415 = vmatpush.msra.mxu0 %v32
  %416 = vmatpush.msra.mxu0 %v30
  %417 = vmatpush.msra.mxu0 %v28
  %418 = vmatpush.msra.mxu0 %v26
  %419 = vmatpush.msra.mxu0 %v24
  %420 = vmatmul.f32.gmra.mxu0 %v402
  %v421 = vpop.f32.mrf.mxu0
  %v422 = vadd.f32 %v398, %v421
  %423 = vdwg.mxu0
  %424 = vmatpush.msra.mxu0 0.0
  %425 = vmatpush.msra.mxu0 0.0
  %426 = vmatpush.msra.mxu0 0.0
  %427 = vmatpush.msra.mxu0 0.0
  %428 = vmatpush.msra.mxu0 0.0
  %429 = vmatpush.msra.mxu0 0.0
  %430 = vmatpush.msra.mxu0 0.0
  %431 = vmatpush.msra.mxu0 0.0
  %432 = vmatpush.msra.mxu0 %v39
  %433 = vmatpush.msra.mxu0 %v37
  %434 = vmatpush.msra.mxu0 %v35
  %435 = vmatpush.msra.mxu0 %v33
  %436 = vmatpush.msra.mxu0 %v31
  %437 = vmatpush.msra.mxu0 %v29
  %438 = vmatpush.msra.mxu0 %v27
  %439 = vmatpush.msra.mxu0 %v25
  %440 = vmatmul.f32.gmra.mxu0 %v402
  %v441 = vpop.f32.mrf.mxu0
  %v442 = vadd.f32 %v399, %v441
  %443 = vdwg.mxu0
  %v444 = vtanh.pop %v422
  %v445 = vtanh.pop %v442
  %v446 = vmul.f32 %v444, 0.5
  %v447 = vadd.f32 %v446, 0.5
  %v448 = vmul.f32 %v445, 0.5
  %v449 = vadd.f32 %v448, 0.5
  %v450 = vmul.f32 %v447, %v387
  %v451 = vmul.f32 %v447, %v445
  %453 = vrot.lane.b32.xlu0 %v451, 64
  %v454 = vpop.permute.xlu0 %453
  %v456 = vadd.f32 %v450, %v454
  %v457 = vtanh.pop %v456
  %v458 = vmul.f32 %v449, %v457
  %460 = vrot.lane.b32.xlu0 %v458, 64
  %v461 = vpop.permute.xlu0 %460
  %463 = vst.msk [vmem:[%s4 + $0x3] sm:$0x1] %vm255, %v461
  %s464 = scalar_lea.vmem [#allocation2], 5
  %v465 = vld [vmem:[%s464] ss:$8 sm:$0x3]
  %v467 = vperm.slane %v465, 0
  %v468 = vperm.slane %v465, 1
  %v471 = vsel %vm108, %v461, 0
  %473 = vmatpush.msra.mxu0 0.0
  %474 = vmatpush.msra.mxu0 0.0
  %475 = vmatpush.msra.mxu0 0.0
  %476 = vmatpush.msra.mxu0 0.0
  %477 = vmatpush.msra.mxu0 0.0
  %478 = vmatpush.msra.mxu0 0.0
  %479 = vmatpush.msra.mxu0 0.0
  %480 = vmatpush.msra.mxu0 0.0
  %481 = vmatpush.msra.mxu0 %v38
  %482 = vmatpush.msra.mxu0 %v36
  %483 = vmatpush.msra.mxu0 %v34
  %484 = vmatpush.msra.mxu0 %v32
  %485 = vmatpush.msra.mxu0 %v30
  %486 = vmatpush.msra.mxu0 %v28
  %487 = vmatpush.msra.mxu0 %v26
  %488 = vmatpush.msra.mxu0 %v24
  %489 = vmatmul.f32.gmra.mxu0 %v471
  %v490 = vpop.f32.mrf.mxu0
  %v491 = vadd.f32 %v467, %v490
  %492 = vdwg.mxu0
  %493 = vmatpush.msra.mxu0 0.0
  %494 = vmatpush.msra.mxu0 0.0
  %495 = vmatpush.msra.mxu0 0.0
  %496 = vmatpush.msra.mxu0 0.0
  %497 = vmatpush.msra.mxu0 0.0
  %498 = vmatpush.msra.mxu0 0.0
  %499 = vmatpush.msra.mxu0 0.0
  %500 = vmatpush.msra.mxu0 0.0
  %501 = vmatpush.msra.mxu0 %v39
  %502 = vmatpush.msra.mxu0 %v37
  %503 = vmatpush.msra.mxu0 %v35
  %504 = vmatpush.msra.mxu0 %v33
  %505 = vmatpush.msra.mxu0 %v31
  %506 = vmatpush.msra.mxu0 %v29
  %507 = vmatpush.msra.mxu0 %v27
  %508 = vmatpush.msra.mxu0 %v25
  %509 = vmatmul.f32.gmra.mxu0 %v471
  %v510 = vpop.f32.mrf.mxu0
  %v511 = vadd.f32 %v468, %v510
  %512 = vdwg.mxu0
  %v513 = vtanh.pop %v491
  %v514 = vtanh.pop %v511
  %v515 = vmul.f32 %v513, 0.5
  %v516 = vadd.f32 %v515, 0.5
  %v517 = vmul.f32 %v514, 0.5
  %v518 = vadd.f32 %v517, 0.5
  %v519 = vmul.f32 %v516, %v456
  %v520 = vmul.f32 %v516, %v514
  %522 = vrot.lane.b32.xlu0 %v520, 64
  %v523 = vpop.permute.xlu0 %522
  %v525 = vadd.f32 %v519, %v523
  %v526 = vtanh.pop %v525
  %v527 = vmul.f32 %v518, %v526
  %529 = vrot.lane.b32.xlu0 %v527, 64
  %v530 = vpop.permute.xlu0 %529
  %532 = vst.msk [vmem:[%s4 + $0x4] sm:$0x1] %vm255, %v530
  %s533 = scalar_lea.vmem [#allocation2], 6
  %v534 = vld [vmem:[%s533] ss:$8 sm:$0x3]
  %v536 = vperm.slane %v534, 0
  %v537 = vperm.slane %v534, 1
  %v540 = vsel %vm108, %v530, 0
  %542 = vmatpush.msra.mxu0 0.0
  %543 = vmatpush.msra.mxu0 0.0
  %544 = vmatpush.msra.mxu0 0.0
  %545 = vmatpush.msra.mxu0 0.0
  %546 = vmatpush.msra.mxu0 0.0
  %547 = vmatpush.msra.mxu0 0.0
  %548 = vmatpush.msra.mxu0 0.0
  %549 = vmatpush.msra.mxu0 0.0
  %550 = vmatpush.msra.mxu0 %v38
  %551 = vmatpush.msra.mxu0 %v36
  %552 = vmatpush.msra.mxu0 %v34
  %553 = vmatpush.msra.mxu0 %v32
  %554 = vmatpush.msra.mxu0 %v30
  %555 = vmatpush.msra.mxu0 %v28
  %556 = vmatpush.msra.mxu0 %v26
  %557 = vmatpush.msra.mxu0 %v24
  %558 = vmatmul.f32.gmra.mxu0 %v540
  %v559 = vpop.f32.mrf.mxu0
  %v560 = vadd.f32 %v536, %v559
  %561 = vdwg.mxu0
  %562 = vmatpush.msra.mxu0 0.0
  %563 = vmatpush.msra.mxu0 0.0
  %564 = vmatpush.msra.mxu0 0.0
  %565 = vmatpush.msra.mxu0 0.0
  %566 = vmatpush.msra.mxu0 0.0
  %567 = vmatpush.msra.mxu0 0.0
  %568 = vmatpush.msra.mxu0 0.0
  %569 = vmatpush.msra.mxu0 0.0
  %570 = vmatpush.msra.mxu0 %v39
  %571 = vmatpush.msra.mxu0 %v37
  %572 = vmatpush.msra.mxu0 %v35
  %573 = vmatpush.msra.mxu0 %v33
  %574 = vmatpush.msra.mxu0 %v31
  %575 = vmatpush.msra.mxu0 %v29
  %576 = vmatpush.msra.mxu0 %v27
  %577 = vmatpush.msra.mxu0 %v25
  %578 = vmatmul.f32.gmra.mxu0 %v540
  %v579 = vpop.f32.mrf.mxu0
  %v580 = vadd.f32 %v537, %v579
  %581 = vdwg.mxu0
  %v582 = vtanh.pop %v560
  %v583 = vtanh.pop %v580
  %v584 = vmul.f32 %v582, 0.5
  %v585 = vadd.f32 %v584, 0.5
  %v586 = vmul.f32 %v583, 0.5
  %v587 = vadd.f32 %v586, 0.5
  %v588 = vmul.f32 %v585, %v525
  %v589 = vmul.f32 %v585, %v583
  %591 = vrot.lane.b32.xlu0 %v589, 64
  %v592 = vpop.permute.xlu0 %591
  %v594 = vadd.f32 %v588, %v592
  %v595 = vtanh.pop %v594
  %v596 = vmul.f32 %v587, %v595
  %598 = vrot.lane.b32.xlu0 %v596, 64
  %v599 = vpop.permute.xlu0 %598
  %601 = vst.msk [vmem:[%s4 + $0x5] sm:$0x1] %vm255, %v599
  %s602 = scalar_lea.vmem [#allocation2], 7
  %v603 = vld [vmem:[%s602] ss:$8 sm:$0x3]
  %v605 = vperm.slane %v603, 0
  %v606 = vperm.slane %v603, 1
  %v609 = vsel %vm108, %v599, 0
  %611 = vmatpush.msra.mxu0 0.0
  %612 = vmatpush.msra.mxu0 0.0
  %613 = vmatpush.msra.mxu0 0.0
  %614 = vmatpush.msra.mxu0 0.0
  %615 = vmatpush.msra.mxu0 0.0
  %616 = vmatpush.msra.mxu0 0.0
  %617 = vmatpush.msra.mxu0 0.0
  %618 = vmatpush.msra.mxu0 0.0
  %619 = vmatpush.msra.mxu0 %v38
  %620 = vmatpush.msra.mxu0 %v36
  %621 = vmatpush.msra.mxu0 %v34
  %622 = vmatpush.msra.mxu0 %v32
  %623 = vmatpush.msra.mxu0 %v30
  %624 = vmatpush.msra.mxu0 %v28
  %625 = vmatpush.msra.mxu0 %v26
  %626 = vmatpush.msra.mxu0 %v24
  %627 = vmatmul.f32.gmra.mxu0 %v609
  %v628 = vpop.f32.mrf.mxu0
  %v629 = vadd.f32 %v605, %v628
  %630 = vdwg.mxu0
  %631 = vmatpush.msra.mxu0 0.0
  %632 = vmatpush.msra.mxu0 0.0
  %633 = vmatpush.msra.mxu0 0.0
  %634 = vmatpush.msra.mxu0 0.0
  %635 = vmatpush.msra.mxu0 0.0
  %636 = vmatpush.msra.mxu0 0.0
  %637 = vmatpush.msra.mxu0 0.0
  %638 = vmatpush.msra.mxu0 0.0
  %639 = vmatpush.msra.mxu0 %v39
  %640 = vmatpush.msra.mxu0 %v37
  %641 = vmatpush.msra.mxu0 %v35
  %642 = vmatpush.msra.mxu0 %v33
  %643 = vmatpush.msra.mxu0 %v31
  %644 = vmatpush.msra.mxu0 %v29
  %645 = vmatpush.msra.mxu0 %v27
  %646 = vmatpush.msra.mxu0 %v25
  %647 = vmatmul.f32.gmra.mxu0 %v609
  %v648 = vpop.f32.mrf.mxu0
  %v649 = vadd.f32 %v606, %v648
  %650 = vdwg.mxu0
  %v651 = vtanh.pop %v629
  %v652 = vtanh.pop %v649
  %v653 = vmul.f32 %v651, 0.5
  %v654 = vadd.f32 %v653, 0.5
  %v655 = vmul.f32 %v652, 0.5
  %v656 = vadd.f32 %v655, 0.5
  %v657 = vmul.f32 %v654, %v594
  %v658 = vmul.f32 %v654, %v652
  %660 = vrot.lane.b32.xlu0 %v658, 64
  %v661 = vpop.permute.xlu0 %660
  %v663 = vadd.f32 %v657, %v661
  %v664 = vtanh.pop %v663
  %v665 = vmul.f32 %v656, %v664
  %667 = vrot.lane.b32.xlu0 %v665, 64
  %v668 = vpop.permute.xlu0 %667
  %670 = vst.msk [vmem:[%s4 + $0x6] sm:$0x1] %vm255, %v668
  %v671 = vsel %vm108, %v668, 0
  %673 = vmatpush.msra.mxu0 0.0
  %674 = vmatpush.msra.mxu0 0.0
  %675 = vmatpush.msra.mxu0 0.0
  %676 = vmatpush.msra.mxu0 0.0
  %677 = vmatpush.msra.mxu0 0.0
  %678 = vmatpush.msra.mxu0 0.0
  %679 = vmatpush.msra.mxu0 0.0
  %680 = vmatpush.msra.mxu0 0.0
  %681 = vmatpush.msra.mxu0 %v38
  %682 = vmatpush.msra.mxu0 %v36
  %683 = vmatpush.msra.mxu0 %v34
  %684 = vmatpush.msra.mxu0 %v32
  %685 = vmatpush.msra.mxu0 %v30
  %686 = vmatpush.msra.mxu0 %v28
  %687 = vmatpush.msra.mxu0 %v26
  %688 = vmatpush.msra.mxu0 %v24
  %689 = vmatmul.f32.gmra.mxu0 %v671
  %v690 = vpop.f32.mrf.mxu0
  %v691 = vadd.f32 %v47, %v690
  %692 = vdwg.mxu0
  %693 = vmatpush.msra.mxu0 0.0
  %694 = vmatpush.msra.mxu0 0.0
  %695 = vmatpush.msra.mxu0 0.0
  %696 = vmatpush.msra.mxu0 0.0
  %697 = vmatpush.msra.mxu0 0.0
  %698 = vmatpush.msra.mxu0 0.0
  %699 = vmatpush.msra.mxu0 0.0
  %700 = vmatpush.msra.mxu0 0.0
  %701 = vmatpush.msra.mxu0 %v39
  %702 = vmatpush.msra.mxu0 %v37
  %703 = vmatpush.msra.mxu0 %v35
  %704 = vmatpush.msra.mxu0 %v33
  %705 = vmatpush.msra.mxu0 %v31
  %706 = vmatpush.msra.mxu0 %v29
  %707 = vmatpush.msra.mxu0 %v27
  %708 = vmatpush.msra.mxu0 %v25
  %709 = vmatmul.f32.gmra.mxu0 %v671
  %v710 = vpop.f32.mrf.mxu0
  %v711 = vadd.f32 %v48, %v710
  %712 = vdwg.mxu0
  %v713 = vtanh.pop %v691
  %v714 = vtanh.pop %v711
  %v715 = vmul.f32 %v713, 0.5
  %v716 = vadd.f32 %v715, 0.5
  %v717 = vmul.f32 %v714, 0.5
  %v718 = vadd.f32 %v717, 0.5
  %v719 = vmul.f32 %v716, %v663
  %v720 = vmul.f32 %v716, %v714
  %722 = vrot.lane.b32.xlu0 %v720, 64
  %v723 = vpop.permute.xlu0 %722
  %v725 = vadd.f32 %v719, %v723
  %v726 = vtanh.pop %v725
  %v727 = vmul.f32 %v718, %v726
  %729 = vrot.lane.b32.xlu0 %v727, 64
  %v730 = vpop.permute.xlu0 %729
  %v732 = vsel %vm99, %v668, %v730
  %734 = vrot.lane.b32.xlu0 %v663, 64
  %v735 = vpop.permute.xlu0 %734
  %738 = vrot.lane.b32.xlu0 %v725, 64
  %v739 = vpop.permute.xlu0 %738
  %v741 = vsel %vm99, %v735, %v739
  %742 = vst.msk [vmem:[%s4 + $0x7] sm:$0x1] %vm255, %v732
  %743 = vst.msk [vmem:[#allocation3] sm:$0x1] %vm255, %v732
  %744 = vst.msk [vmem:[#allocation4] sm:$0x1] %vm255, %v741
  // Predicated region
  $region22: #{lstm_forward.1} parent=0 // pred_check
    _
  $region23: #{lstm_forward.1} parent=0 // pred_check_branch
    %746 = sbr.rel (0) target = $region25
  $region24: #{lstm_forward.1} parent=0 // pred_region
    _
  $region25: #{lstm_forward.1} parent=0 // pred_fallthru
    _
  // Predicated region
  $region26: #{lstm_forward.1} parent=0 // pred_check
    _
  $region27: #{lstm_forward.1} parent=0 // pred_check_branch
    %748 = sbr.rel (0) target = $region29
  $region28: #{lstm_forward.1} parent=0 // pred_region
    _
  $region29: #{lstm_forward.1} parent=0 // pred_fallthru
    _

</llo_original>
